<compile_context>
chip_gen: v7x
topology: tpu7x:2x2x1
jax: 0.10.0
libtpu: 0.0.40
codegen_flags: <defaults>
</compile_context>

<pallas_src>
import jax
import jax.numpy as jnp
from jax import lax
from jax.experimental import pallas as pl
from jax.experimental.pallas import tpu as pltpu


def _rnn_kernel(x_ref, wi_ref, b_ref, whT_ref, wo_ref, bo_ref,
                y_ref, hseq_ref, h_state):
    """One grid step processes block_t timesteps.

    x_ref    : (block_t, nb, 1)   input chunk (nb on sublanes)
    wi_ref   : (1, nh)            w_i laid out as a row
    b_ref    : (1, nh)            b_i + b_h (pre-combined)
    whT_ref  : (nh, nh)           w_h.T  (so the recurrence is h @ whT)
    wo_ref   : (1, nh)            w_o laid out as a row
    bo_ref   : (1, 1)             b_o
    y_ref    : (block_t, nb)      output chunk (lane-dense)
    hseq_ref : (block_t, nb, nh)  hidden-state history chunk
    h_state  : VMEM (nb, nh) f32  hidden state carried across grid steps
    """
    c = pl.program_id(0)

    @pl.when(c == 0)
    def _():
        # torch forward uses h0 = zeros (the nn.Parameter h0 is unused).
        h_state[...] = jnp.zeros_like(h_state)

    block_t = x_ref.shape[0]
    nh = whT_ref.shape[0]

    wi = wi_ref[...].reshape(1, 1, nh)     # (1, 1, nh)
    b = b_ref[...].reshape(1, 1, nh)       # (1, 1, nh)
    whT = whT_ref[...]                     # (nh, nh)

    # Rank-1 input drive for the whole chunk, computed once (vectorized over
    # time) and staged into the output block, hoisting all VPU broadcast work
    # out of the sequential recurrence.
    hseq_ref[...] = x_ref[...] * wi + b    # (block_t, nb, nh)

    def step(t, h_prev):
        h1 = hseq_ref[t] + jnp.dot(h_prev, whT,
                                   preferred_element_type=jnp.float32)
        hseq_ref[t] = h1                   # (nb, nh)
        return h1

    # Fully unrolled short fixed-trip-count loop; the carry stays in vregs,
    # only the cross-chunk handoff touches the VMEM scratch.
    h_state[...] = lax.fori_loop(0, block_t, step, h_state[...], unroll=True)

    # y for the whole chunk in one shot: y[t, b] = sum_n h[t, b, n]*w_o[n] + b_o
    # (VPU multiply + XLU lane-reduce; avoids block_t tiny nh x 1 MXU dots).
    wo = wo_ref[...].reshape(1, 1, nh)
    y = jnp.sum(hseq_ref[...] * wo, axis=-1) + bo_ref[...]   # (block_t, nb)
    y_ref[...] = y.astype(y_ref.dtype)


def _pick_block_t(nt):
    # Prefer a multiple of 8 dividing nt (keeps the (8,128) rule for the
    # (block_t, nb) y block); otherwise fall back to the full extent.
    for bt in (64, 32, 16, 8):
        if nt % bt == 0:
            return bt
    return nt


def rnn_model_forward(x, w_i, b_i, w_h, b_h, w_o, b_o, *, block_t=None):
    """Pallas implementation of RnnModel.forward.

    x   : (nt, nb) float32
    w_i : (nh, 1), b_i : (nh,)
    w_h : (nh, nh), b_h : (nh,)
    w_o : (1, nh),  b_o : (1,)
    returns (y, h) with y: (nt, nb), h: (nt, nb, nh)
    """
    nt, nb = x.shape
    nh = w_h.shape[0]
    if block_t is None:
        block_t = _pick_block_t(nt)
    assert nt % block_t == 0, "block_t must divide nt"
    assert block_t == nt or block_t % 8 == 0, "block_t must be nt or a multiple of 8"

    x3 = jnp.asarray(x, jnp.float32).reshape(nt, nb, 1)
    wi_row = jnp.asarray(w_i, jnp.float32).reshape(1, nh)
    b_row = (jnp.asarray(b_i, jnp.float32)
             + jnp.asarray(b_h, jnp.float32)).reshape(1, nh)
    whT = jnp.asarray(w_h, jnp.float32).T
    wo_row = jnp.asarray(w_o, jnp.float32).reshape(1, nh)
    bo = jnp.asarray(b_o, jnp.float32).reshape(1, 1)

    grid = (nt // block_t,)
    param_nh = pl.BlockSpec((1, nh), lambda c: (0, 0))

    y, h = pl.pallas_call(
        _rnn_kernel,
        out_shape=(jax.ShapeDtypeStruct((nt, nb), jnp.float32),
                   jax.ShapeDtypeStruct((nt, nb, nh), jnp.float32)),
        grid_spec=pltpu.PrefetchScalarGridSpec(
            num_scalar_prefetch=0,
            grid=grid,
            in_specs=[
                pl.BlockSpec((block_t, nb, 1), lambda c: (c, 0, 0)),  # x chunk
                param_nh,                                             # w_i row
                param_nh,                                             # b_i + b_h
                pl.BlockSpec((nh, nh), lambda c: (0, 0)),             # w_h.T
                param_nh,                                             # w_o row
                pl.BlockSpec((1, 1), lambda c: (0, 0)),               # b_o
            ],
            out_specs=[
                pl.BlockSpec((block_t, nb), lambda c: (c, 0)),         # y
                pl.BlockSpec((block_t, nb, nh), lambda c: (c, 0, 0)),  # h history
            ],
            scratch_shapes=[pltpu.VMEM((nb, nh), jnp.float32)],        # carried h
        ),
        compiler_params=pltpu.CompilerParams(
            # Time recurrence is sequential: must be "arbitrary".
            dimension_semantics=("arbitrary",),
        ),
    )(x3, wi_row, b_row, whT, wo_row, bo)

    return y, h


def _reference(x, w_i, b_i, w_h, b_h, w_o, b_o):
    nt, nb = x.shape
    nh = w_h.shape[0]
    h = jnp.zeros((nb, nh), jnp.float32)
    ys, hs = [], []
    for k in range(nt):
        h = x[k][:, None] @ w_i.T + b_i + h @ w_h.T + b_h
        y = h @ w_o.T + b_o
        ys.append(y[:, 0])
        hs.append(h)
    return jnp.stack(ys), jnp.stack(hs)


if __name__ == "__main__":
    nh = 32   # hidden size
    nb = 8    # batch (grid cells)
    nt = 16   # timesteps

    key = jax.random.PRNGKey(0)
    ks = jax.random.split(key, 7)
    std = 1.0 / (nh ** 0.5)

    def unif(k, shape):
        return jax.random.uniform(k, shape, jnp.float32, -std, std)

    x = jax.random.normal(ks[0], (nt, nb), dtype=jnp.float32)
    w_i = unif(ks[1], (nh, 1))
    w_h = unif(ks[2], (nh, nh))
    w_o = unif(ks[3], (1, nh))
    b_i = unif(ks[4], (nh,))
    b_h = unif(ks[5], (nh,))
    b_o = unif(ks[6], (1,))

    # block_t=8 -> grid of 2 chunks, exercising the cross-chunk VMEM carry.
    y, h = rnn_model_forward(x, w_i, b_i, w_h, b_h, w_o, b_o, block_t=8)
    jax.block_until_ready((y, h))

    y_exp, h_exp = _reference(x, w_i, b_i, w_h, b_h, w_o, b_o)
    assert jnp.allclose(y, y_exp, atol=1e-5, rtol=1e-5), float(jnp.max(jnp.abs(y - y_exp)))
    assert jnp.allclose(h, h_exp, atol=1e-5, rtol=1e-5), float(jnp.max(jnp.abs(h - h_exp)))

    print("KERNEL_OK")
</pallas_src>

<mosaic_0001>
module attributes {stable_mosaic.version = 11 : i64} {
  func.func @_rnn_kernel(%arg0: i32, %arg1: memref<8x8x1xf32, #tpu.memory_space<vmem>>, %arg2: memref<1x32xf32, #tpu.memory_space<vmem>>, %arg3: memref<1x32xf32, #tpu.memory_space<vmem>>, %arg4: memref<32x32xf32, #tpu.memory_space<vmem>>, %arg5: memref<1x32xf32, #tpu.memory_space<vmem>>, %arg6: memref<1x1xf32, #tpu.memory_space<vmem>>, %arg7: memref<8x8xf32, #tpu.memory_space<vmem>>, %arg8: memref<8x8x32xf32, #tpu.memory_space<vmem>>, %arg9: memref<8x32xf32, #tpu.memory_space<vmem>>) attributes {dimension_semantics = [#tpu.dimension_semantics<arbitrary>], iteration_bounds = array<i64: 2>, scalar_prefetch = 0 : i64, scratch_operands = 1 : i64, tpu.core_type = #tpu.core_type<tc>, window_params = [{transform_indices = @transform_0, window_bounds = array<i64: 8, 8, 1>}, {pipeline_mode = #tpu.pipeline_mode<synchronous>, transform_indices = @transform_1, window_bounds = array<i64: 1, 32>}, {pipeline_mode = #tpu.pipeline_mode<synchronous>, transform_indices = @transform_2, window_bounds = array<i64: 1, 32>}, {pipeline_mode = #tpu.pipeline_mode<synchronous>, transform_indices = @transform_3, window_bounds = array<i64: 32, 32>}, {pipeline_mode = #tpu.pipeline_mode<synchronous>, transform_indices = @transform_4, window_bounds = array<i64: 1, 32>}, {pipeline_mode = #tpu.pipeline_mode<synchronous>, transform_indices = @transform_5, window_bounds = array<i64: 1, 1>}, {transform_indices = @transform_6, window_bounds = array<i64: 8, 8>}, {transform_indices = @transform_7, window_bounds = array<i64: 8, 8, 32>}]} {
    %c0_i32 = arith.constant 0 : i32
    %0 = arith.cmpi eq, %arg0, %c0_i32 : i32
    %1 = arith.extui %0 : i1 to i32
    %c0_i32_0 = arith.constant 0 : i32
    %2 = arith.cmpi ne, %1, %c0_i32_0 : i32
    scf.if %2 {
      %cst_66 = arith.constant 0.000000e+00 : f32
      %99 = vector.broadcast %cst_66 : f32 to vector<8x32xf32>
      %c0_67 = arith.constant 0 : index
      %c0_68 = arith.constant 0 : index
      %100 = vector.load %arg9[%c0_67, %c0_68] : memref<8x32xf32, #tpu.memory_space<vmem>>, vector<8x32xf32>
      tpu.vector_store %arg9[%c0_67, %c0_68], %99 {strides = array<i32>} : memref<8x32xf32, #tpu.memory_space<vmem>>, vector<8x32xf32>,
    } else {
    }
    %c0 = arith.constant 0 : index
    %c0_1 = arith.constant 0 : index
    %3 = vector.load %arg2[%c0, %c0_1] : memref<1x32xf32, #tpu.memory_space<vmem>>, vector<1x32xf32>
    %4 = vector.shape_cast %3 : vector<1x32xf32> to vector<1x1x32xf32>
    %c0_2 = arith.constant 0 : index
    %c0_3 = arith.constant 0 : index
    %5 = vector.load %arg3[%c0_2, %c0_3] : memref<1x32xf32, #tpu.memory_space<vmem>>, vector<1x32xf32>
    %6 = vector.shape_cast %5 : vector<1x32xf32> to vector<1x1x32xf32>
    %c0_4 = arith.constant 0 : index
    %c0_5 = arith.constant 0 : index
    %7 = vector.load %arg4[%c0_4, %c0_5] : memref<32x32xf32, #tpu.memory_space<vmem>>, vector<32x32xf32>
    %c0_6 = arith.constant 0 : index
    %c0_7 = arith.constant 0 : index
    %c0_8 = arith.constant 0 : index
    %8 = vector.load %arg1[%c0_6, %c0_7, %c0_8] : memref<8x8x1xf32, #tpu.memory_space<vmem>>, vector<8x8x1xf32>
    %9 = vector.broadcast %8 : vector<8x8x1xf32> to vector<8x8x32xf32>
    %10 = vector.broadcast %4 : vector<1x1x32xf32> to vector<8x8x32xf32>
    %11 = arith.mulf %9, %10 : vector<8x8x32xf32>
    %12 = vector.broadcast %6 : vector<1x1x32xf32> to vector<8x8x32xf32>
    %13 = arith.addf %11, %12 : vector<8x8x32xf32>
    %c0_9 = arith.constant 0 : index
    %c0_10 = arith.constant 0 : index
    %c0_11 = arith.constant 0 : index
    %14 = vector.load %arg8[%c0_9, %c0_10, %c0_11] : memref<8x8x32xf32, #tpu.memory_space<vmem>>, vector<8x8x32xf32>
    tpu.vector_store %arg8[%c0_9, %c0_10, %c0_11], %13 {strides = array<i32>} : memref<8x8x32xf32, #tpu.memory_space<vmem>>, vector<8x8x32xf32>,
    %c0_12 = arith.constant 0 : index
    %c0_13 = arith.constant 0 : index
    %15 = vector.load %arg9[%c0_12, %c0_13] : memref<8x32xf32, #tpu.memory_space<vmem>>, vector<8x32xf32>
    %c0_i32_14 = arith.constant 0 : i32
    %16 = arith.index_cast %c0_i32_14 : i32 to index
    %c0_15 = arith.constant 0 : index
    %c0_16 = arith.constant 0 : index
    %17 = vector.load %arg8[%16, %c0_15, %c0_16] : memref<8x8x32xf32, #tpu.memory_space<vmem>>, vector<1x8x32xf32>
    %18 = vector.shape_cast %17 : vector<1x8x32xf32> to vector<8x32xf32>
    %cst = arith.constant dense<0.000000e+00> : vector<8x32xf32>
    %19 = tpu.matmul %15, %7, %cst {dimension_numbers = #tpu.dot_dimension_numbers<[1], [0], [0], [1], [0, 0, 1, 1], [], []>} : vector<8x32xf32>, vector<32x32xf32>, vector<8x32xf32> -> vector<8x32xf32>
    %20 = arith.addf %18, %19 : vector<8x32xf32>
    %21 = arith.index_cast %c0_i32_14 : i32 to index
    %c0_17 = arith.constant 0 : index
    %c0_18 = arith.constant 0 : index
    %22 = vector.load %arg8[%21, %c0_17, %c0_18] : memref<8x8x32xf32, #tpu.memory_space<vmem>>, vector<1x8x32xf32>
    %23 = vector.shape_cast %22 : vector<1x8x32xf32> to vector<8x32xf32>
    %24 = vector.shape_cast %20 : vector<8x32xf32> to vector<1x8x32xf32>
    tpu.vector_store %arg8[%21, %c0_17, %c0_18], %24 {strides = array<i32>} : memref<8x8x32xf32, #tpu.memory_space<vmem>>, vector<1x8x32xf32>,
    %c1_i32 = arith.constant 1 : i32
    %25 = arith.index_cast %c1_i32 : i32 to index
    %c0_19 = arith.constant 0 : index
    %c0_20 = arith.constant 0 : index
    %26 = vector.load %arg8[%25, %c0_19, %c0_20] : memref<8x8x32xf32, #tpu.memory_space<vmem>>, vector<1x8x32xf32>
    %27 = vector.shape_cast %26 : vector<1x8x32xf32> to vector<8x32xf32>
    %cst_21 = arith.constant dense<0.000000e+00> : vector<8x32xf32>
    %28 = tpu.matmul %20, %7, %cst_21 {dimension_numbers = #tpu.dot_dimension_numbers<[1], [0], [0], [1], [0, 0, 1, 1], [], []>} : vector<8x32xf32>, vector<32x32xf32>, vector<8x32xf32> -> vector<8x32xf32>
    %29 = arith.addf %27, %28 : vector<8x32xf32>
    %30 = arith.index_cast %c1_i32 : i32 to index
    %c0_22 = arith.constant 0 : index
    %c0_23 = arith.constant 0 : index
    %31 = vector.load %arg8[%30, %c0_22, %c0_23] : memref<8x8x32xf32, #tpu.memory_space<vmem>>, vector<1x8x32xf32>
    %32 = vector.shape_cast %31 : vector<1x8x32xf32> to vector<8x32xf32>
    %33 = vector.shape_cast %29 : vector<8x32xf32> to vector<1x8x32xf32>
    tpu.vector_store %arg8[%30, %c0_22, %c0_23], %33 {strides = array<i32>} : memref<8x8x32xf32, #tpu.memory_space<vmem>>, vector<1x8x32xf32>,
    %c2_i32 = arith.constant 2 : i32
    %34 = arith.index_cast %c2_i32 : i32 to index
    %c0_24 = arith.constant 0 : index
    %c0_25 = arith.constant 0 : index
    %35 = vector.load %arg8[%34, %c0_24, %c0_25] : memref<8x8x32xf32, #tpu.memory_space<vmem>>, vector<1x8x32xf32>
    %36 = vector.shape_cast %35 : vector<1x8x32xf32> to vector<8x32xf32>
    %cst_26 = arith.constant dense<0.000000e+00> : vector<8x32xf32>
    %37 = tpu.matmul %29, %7, %cst_26 {dimension_numbers = #tpu.dot_dimension_numbers<[1], [0], [0], [1], [0, 0, 1, 1], [], []>} : vector<8x32xf32>, vector<32x32xf32>, vector<8x32xf32> -> vector<8x32xf32>
    %38 = arith.addf %36, %37 : vector<8x32xf32>
    %39 = arith.index_cast %c2_i32 : i32 to index
    %c0_27 = arith.constant 0 : index
    %c0_28 = arith.constant 0 : index
    %40 = vector.load %arg8[%39, %c0_27, %c0_28] : memref<8x8x32xf32, #tpu.memory_space<vmem>>, vector<1x8x32xf32>
    %41 = vector.shape_cast %40 : vector<1x8x32xf32> to vector<8x32xf32>
    %42 = vector.shape_cast %38 : vector<8x32xf32> to vector<1x8x32xf32>
    tpu.vector_store %arg8[%39, %c0_27, %c0_28], %42 {strides = array<i32>} : memref<8x8x32xf32, #tpu.memory_space<vmem>>, vector<1x8x32xf32>,
    %c3_i32 = arith.constant 3 : i32
    %43 = arith.index_cast %c3_i32 : i32 to index
    %c0_29 = arith.constant 0 : index
    %c0_30 = arith.constant 0 : index
    %44 = vector.load %arg8[%43, %c0_29, %c0_30] : memref<8x8x32xf32, #tpu.memory_space<vmem>>, vector<1x8x32xf32>
    %45 = vector.shape_cast %44 : vector<1x8x32xf32> to vector<8x32xf32>
    %cst_31 = arith.constant dense<0.000000e+00> : vector<8x32xf32>
    %46 = tpu.matmul %38, %7, %cst_31 {dimension_numbers = #tpu.dot_dimension_numbers<[1], [0], [0], [1], [0, 0, 1, 1], [], []>} : vector<8x32xf32>, vector<32x32xf32>, vector<8x32xf32> -> vector<8x32xf32>
    %47 = arith.addf %45, %46 : vector<8x32xf32>
    %48 = arith.index_cast %c3_i32 : i32 to index
    %c0_32 = arith.constant 0 : index
    %c0_33 = arith.constant 0 : index
    %49 = vector.load %arg8[%48, %c0_32, %c0_33] : memref<8x8x32xf32, #tpu.memory_space<vmem>>, vector<1x8x32xf32>
    %50 = vector.shape_cast %49 : vector<1x8x32xf32> to vector<8x32xf32>
    %51 = vector.shape_cast %47 : vector<8x32xf32> to vector<1x8x32xf32>
    tpu.vector_store %arg8[%48, %c0_32, %c0_33], %51 {strides = array<i32>} : memref<8x8x32xf32, #tpu.memory_space<vmem>>, vector<1x8x32xf32>,
    %c4_i32 = arith.constant 4 : i32
    %52 = arith.index_cast %c4_i32 : i32 to index
    %c0_34 = arith.constant 0 : index
    %c0_35 = arith.constant 0 : index
    %53 = vector.load %arg8[%52, %c0_34, %c0_35] : memref<8x8x32xf32, #tpu.memory_space<vmem>>, vector<1x8x32xf32>
    %54 = vector.shape_cast %53 : vector<1x8x32xf32> to vector<8x32xf32>
    %cst_36 = arith.constant dense<0.000000e+00> : vector<8x32xf32>
    %55 = tpu.matmul %47, %7, %cst_36 {dimension_numbers = #tpu.dot_dimension_numbers<[1], [0], [0], [1], [0, 0, 1, 1], [], []>} : vector<8x32xf32>, vector<32x32xf32>, vector<8x32xf32> -> vector<8x32xf32>
    %56 = arith.addf %54, %55 : vector<8x32xf32>
    %57 = arith.index_cast %c4_i32 : i32 to index
    %c0_37 = arith.constant 0 : index
    %c0_38 = arith.constant 0 : index
    %58 = vector.load %arg8[%57, %c0_37, %c0_38] : memref<8x8x32xf32, #tpu.memory_space<vmem>>, vector<1x8x32xf32>
    %59 = vector.shape_cast %58 : vector<1x8x32xf32> to vector<8x32xf32>
    %60 = vector.shape_cast %56 : vector<8x32xf32> to vector<1x8x32xf32>
    tpu.vector_store %arg8[%57, %c0_37, %c0_38], %60 {strides = array<i32>} : memref<8x8x32xf32, #tpu.memory_space<vmem>>, vector<1x8x32xf32>,
    %c5_i32 = arith.constant 5 : i32
    %61 = arith.index_cast %c5_i32 : i32 to index
    %c0_39 = arith.constant 0 : index
    %c0_40 = arith.constant 0 : index
    %62 = vector.load %arg8[%61, %c0_39, %c0_40] : memref<8x8x32xf32, #tpu.memory_space<vmem>>, vector<1x8x32xf32>
    %63 = vector.shape_cast %62 : vector<1x8x32xf32> to vector<8x32xf32>
    %cst_41 = arith.constant dense<0.000000e+00> : vector<8x32xf32>
    %64 = tpu.matmul %56, %7, %cst_41 {dimension_numbers = #tpu.dot_dimension_numbers<[1], [0], [0], [1], [0, 0, 1, 1], [], []>} : vector<8x32xf32>, vector<32x32xf32>, vector<8x32xf32> -> vector<8x32xf32>
    %65 = arith.addf %63, %64 : vector<8x32xf32>
    %66 = arith.index_cast %c5_i32 : i32 to index
    %c0_42 = arith.constant 0 : index
    %c0_43 = arith.constant 0 : index
    %67 = vector.load %arg8[%66, %c0_42, %c0_43] : memref<8x8x32xf32, #tpu.memory_space<vmem>>, vector<1x8x32xf32>
    %68 = vector.shape_cast %67 : vector<1x8x32xf32> to vector<8x32xf32>
    %69 = vector.shape_cast %65 : vector<8x32xf32> to vector<1x8x32xf32>
    tpu.vector_store %arg8[%66, %c0_42, %c0_43], %69 {strides = array<i32>} : memref<8x8x32xf32, #tpu.memory_space<vmem>>, vector<1x8x32xf32>,
    %c6_i32 = arith.constant 6 : i32
    %70 = arith.index_cast %c6_i32 : i32 to index
    %c0_44 = arith.constant 0 : index
    %c0_45 = arith.constant 0 : index
    %71 = vector.load %arg8[%70, %c0_44, %c0_45] : memref<8x8x32xf32, #tpu.memory_space<vmem>>, vector<1x8x32xf32>
    %72 = vector.shape_cast %71 : vector<1x8x32xf32> to vector<8x32xf32>
    %cst_46 = arith.constant dense<0.000000e+00> : vector<8x32xf32>
    %73 = tpu.matmul %65, %7, %cst_46 {dimension_numbers = #tpu.dot_dimension_numbers<[1], [0], [0], [1], [0, 0, 1, 1], [], []>} : vector<8x32xf32>, vector<32x32xf32>, vector<8x32xf32> -> vector<8x32xf32>
    %74 = arith.addf %72, %73 : vector<8x32xf32>
    %75 = arith.index_cast %c6_i32 : i32 to index
    %c0_47 = arith.constant 0 : index
    %c0_48 = arith.constant 0 : index
    %76 = vector.load %arg8[%75, %c0_47, %c0_48] : memref<8x8x32xf32, #tpu.memory_space<vmem>>, vector<1x8x32xf32>
    %77 = vector.shape_cast %76 : vector<1x8x32xf32> to vector<8x32xf32>
    %78 = vector.shape_cast %74 : vector<8x32xf32> to vector<1x8x32xf32>
    tpu.vector_store %arg8[%75, %c0_47, %c0_48], %78 {strides = array<i32>} : memref<8x8x32xf32, #tpu.memory_space<vmem>>, vector<1x8x32xf32>,
    %c7_i32 = arith.constant 7 : i32
    %79 = arith.index_cast %c7_i32 : i32 to index
    %c0_49 = arith.constant 0 : index
    %c0_50 = arith.constant 0 : index
    %80 = vector.load %arg8[%79, %c0_49, %c0_50] : memref<8x8x32xf32, #tpu.memory_space<vmem>>, vector<1x8x32xf32>
    %81 = vector.shape_cast %80 : vector<1x8x32xf32> to vector<8x32xf32>
    %cst_51 = arith.constant dense<0.000000e+00> : vector<8x32xf32>
    %82 = tpu.matmul %74, %7, %cst_51 {dimension_numbers = #tpu.dot_dimension_numbers<[1], [0], [0], [1], [0, 0, 1, 1], [], []>} : vector<8x32xf32>, vector<32x32xf32>, vector<8x32xf32> -> vector<8x32xf32>
    %83 = arith.addf %81, %82 : vector<8x32xf32>
    %84 = arith.index_cast %c7_i32 : i32 to index
    %c0_52 = arith.constant 0 : index
    %c0_53 = arith.constant 0 : index
    %85 = vector.load %arg8[%84, %c0_52, %c0_53] : memref<8x8x32xf32, #tpu.memory_space<vmem>>, vector<1x8x32xf32>
    %86 = vector.shape_cast %85 : vector<1x8x32xf32> to vector<8x32xf32>
    %87 = vector.shape_cast %83 : vector<8x32xf32> to vector<1x8x32xf32>
    tpu.vector_store %arg8[%84, %c0_52, %c0_53], %87 {strides = array<i32>} : memref<8x8x32xf32, #tpu.memory_space<vmem>>, vector<1x8x32xf32>,
    %c8_i32 = arith.constant 8 : i32
    %c0_54 = arith.constant 0 : index
    %c0_55 = arith.constant 0 : index
    %88 = vector.load %arg9[%c0_54, %c0_55] : memref<8x32xf32, #tpu.memory_space<vmem>>, vector<8x32xf32>
    tpu.vector_store %arg9[%c0_54, %c0_55], %83 {strides = array<i32>} : memref<8x32xf32, #tpu.memory_space<vmem>>, vector<8x32xf32>,
    %c0_56 = arith.constant 0 : index
    %c0_57 = arith.constant 0 : index
    %89 = vector.load %arg5[%c0_56, %c0_57] : memref<1x32xf32, #tpu.memory_space<vmem>>, vector<1x32xf32>
    %90 = vector.shape_cast %89 : vector<1x32xf32> to vector<1x1x32xf32>
    %c0_58 = arith.constant 0 : index
    %c0_59 = arith.constant 0 : index
    %c0_60 = arith.constant 0 : index
    %91 = vector.load %arg8[%c0_58, %c0_59, %c0_60] : memref<8x8x32xf32, #tpu.memory_space<vmem>>, vector<8x8x32xf32>
    %92 = vector.broadcast %90 : vector<1x1x32xf32> to vector<8x8x32xf32>
    %93 = arith.mulf %91, %92 : vector<8x8x32xf32>
    %cst_61 = arith.constant dense<0.000000e+00> : vector<8x8xf32>
    %94 = vector.multi_reduction <add>, %93, %cst_61 [2] : vector<8x8x32xf32> to vector<8x8xf32>
    %c0_62 = arith.constant 0 : index
    %c0_63 = arith.constant 0 : index
    %95 = vector.load %arg6[%c0_62, %c0_63] : memref<1x1xf32, #tpu.memory_space<vmem>>, vector<1x1xf32>
    %96 = vector.broadcast %95 : vector<1x1xf32> to vector<8x8xf32>
    %97 = arith.addf %94, %96 : vector<8x8xf32>
    %c0_64 = arith.constant 0 : index
    %c0_65 = arith.constant 0 : index
    %98 = vector.load %arg7[%c0_64, %c0_65] : memref<8x8xf32, #tpu.memory_space<vmem>>, vector<8x8xf32>
    tpu.vector_store %arg7[%c0_64, %c0_65], %97 {strides = array<i32>} : memref<8x8xf32, #tpu.memory_space<vmem>>, vector<8x8xf32>,
    return
  }
  func.func @transform_0(%arg0: i32) -> (i32, i32, i32) {
    %c0_i32 = arith.constant 0 : i32
    %c0_i32_0 = arith.constant 0 : i32
    %c0_i32_1 = arith.constant 0 : i32
    return %arg0, %c0_i32, %c0_i32_0 : i32, i32, i32
  }
  func.func @transform_1(%arg0: i32) -> (i32, i32) {
    %c0_i32 = arith.constant 0 : i32
    %c0_i32_0 = arith.constant 0 : i32
    %c0_i32_1 = arith.constant 0 : i32
    return %c0_i32, %c0_i32_0 : i32, i32
  }
  func.func @transform_2(%arg0: i32) -> (i32, i32) {
    %c0_i32 = arith.constant 0 : i32
    %c0_i32_0 = arith.constant 0 : i32
    %c0_i32_1 = arith.constant 0 : i32
    return %c0_i32, %c0_i32_0 : i32, i32
  }
  func.func @transform_3(%arg0: i32) -> (i32, i32) {
    %c0_i32 = arith.constant 0 : i32
    %c0_i32_0 = arith.constant 0 : i32
    %c0_i32_1 = arith.constant 0 : i32
    return %c0_i32, %c0_i32_0 : i32, i32
  }
  func.func @transform_4(%arg0: i32) -> (i32, i32) {
    %c0_i32 = arith.constant 0 : i32
    %c0_i32_0 = arith.constant 0 : i32
    %c0_i32_1 = arith.constant 0 : i32
    return %c0_i32, %c0_i32_0 : i32, i32
  }
  func.func @transform_5(%arg0: i32) -> (i32, i32) {
    %c0_i32 = arith.constant 0 : i32
    %c0_i32_0 = arith.constant 0 : i32
    %c0_i32_1 = arith.constant 0 : i32
    return %c0_i32, %c0_i32_0 : i32, i32
  }
  func.func @transform_6(%arg0: i32) -> (i32, i32) {
    %c0_i32 = arith.constant 0 : i32
    %c0_i32_0 = arith.constant 0 : i32
    return %arg0, %c0_i32 : i32, i32
  }
  func.func @transform_7(%arg0: i32) -> (i32, i32, i32) {
    %c0_i32 = arith.constant 0 : i32
    %c0_i32_0 = arith.constant 0 : i32
    %c0_i32_1 = arith.constant 0 : i32
    return %arg0, %c0_i32, %c0_i32_0 : i32, i32, i32
  }
}

</mosaic_0001>

<llo_original>
// kernel: tpu_custom_call.1
$region0: #{tpu_custom_call.1}
  #allocation0 [shape = 'u32[]', space=smem, size = 0x4, offset = 0x4, fixed_abs, tag = 'smem constant byte address 0x4 - core index']
  #allocation1 [shape = 'u32[144,128]{1,0:T(1,128)}', space=vmem, size = 0x12000, scoped, tag = 'internal scratch']
  #allocation2 [shape = 'f32[8,32]{1,0:T(8,128)}', space=vmem, size = 0x1000, scoped, tag = 'scratch operand']
  #allocation3 [shape = 'f32[1,1]{1,0:T(1,128)S(1)}', space=vmem, size = 0x200, scoped, tag = 'scoped memory for tpu_custom_call.1']
  %s0 = inlined_call_operand.vmem [shape: f32[16,8,1], index: 0, kind: input, shape index: {}]
  %s1 = inlined_call_operand.vmem [shape: f32[1,32], index: 1, kind: input, shape index: {}]
  %s2 = inlined_call_operand.vmem [shape: f32[1,32], index: 2, kind: input, shape index: {}]
  %s3 = inlined_call_operand.vmem [shape: f32[32,32], index: 3, kind: input, shape index: {}]
  %s4 = inlined_call_operand.vmem [shape: f32[1,32], index: 4, kind: input, shape index: {}]
  %s5 = inlined_call_operand.<no memory space> [shape: f32[1,1], index: 5, kind: input, shape index: {}]
  %s6 = inlined_call_operand.vmem [shape: f32[16,8], index: 6, kind: output, shape index: {0}]
  %s7 = inlined_call_operand.hbm [shape: f32[16,8,32], index: 7, kind: output, shape index: {1}]
  %8 = xla_tuple %s6, %s7
  %s9 = sld [smem:[#allocation0]]
  $region69: #{tpu_custom_call.1} parent=0
    _
  %s11 = ssub.s32 1, %s9
  %s12 = scalar_select 0, %s11, %s9
  %v13 = vstv %s5
  %14 = vst [vmem:[#allocation3] sm:$0x1] %v13
  $region1: #{tpu_custom_call.1} parent=0
    #allocation4 [shape = 'u8[65536]{0}', space=vmem, size = 0x10000, scoped, tag = 'output window, operand 1']
    #allocation5 [shape = 's32[2]{0}', space=sflag, size = 0x8, scoped, tag = 'scoped memory for tpu_custom_call.1']
    %15 = vsyncpa [#allocation5], 0
    %s16 = scalar_lea.sflag [#allocation5], 1
    %17 = vsyncpa %s16, 0
    loop: start=0, step=1, limit=4
    $region2: #{tpu_custom_call.1} parent=1 // loop_pre_header
      _
    $region3: #{tpu_custom_call.1} parent=1 // loop_header
      %s19 = sphi 0, %s23
      %p20 = scmp.ge.s32.totalorder %s19, 4
      %s29 = sphi 0, %s31
      %s32 = sphi 0, %s29
      %s33 = sphi 0, %s32
      %s49 = sphi 0, %s33
      %s53 = sphi 0, %s53
      %s55 = sphi 0, %s53
      %s56 = sphi 0, %s55
      %s70 = sphi 0, %s56
      %s74 = sphi 0, %s74
      %s76 = sphi 0, %s74
      %s77 = sphi 0, %s76
      %s91 = sphi 0, %s77
      %s95 = sphi 0, %s95
      %s97 = sphi 0, %s95
      %s98 = sphi 0, %s97
      %s112 = sphi 0, %s98
      %s116 = sphi 0, %s116
      %s118 = sphi 0, %s116
      %s119 = sphi 0, %s118
      %s133 = sphi 0, %s119
      %s137 = sphi 0, %s137
      %s139 = sphi 0, %s137
      %s140 = sphi 0, %s139
      %s154 = sphi 0, %s140
      %s160 = sphi 0, %s162
      %s163 = sphi 0, %s160
      %s164 = sphi 0, %s163
      %s180 = sphi 0, %s164
      %s186 = sphi 0, %s188
      %s189 = sphi 0, %s186
      %s190 = sphi 0, %s189
      %s206 = sphi 0, %s190
    $region4: #{tpu_custom_call.1} parent=1 // loop_header_branch
      %22 = sbr.rel (%p20) target = $region8
    $region5: #{tpu_custom_call.1} parent=1 // loop_body
      %s24 = ssub.s32 %s19, 1
      %s25 = ssub.s32 %s19, 2
      %s26 = sadd.s32 %s19, 1
      %s27 = ssub.s32 %s19, %s26
      %p28 = scmp.eq.s32.totalorder %s27, 0
      %s30 = sadd.s32 %s29, 1
      %s31 = scalar_select %p28, %s29, %s30
      %p34 = pneg %p28
      %p35 = scmp.eq.s32.totalorder %s19, 1
      %p36 = por %p34, %p35
      %p37 = scmp.ne.s32.totalorder %s29, %s32
      %p38 = scmp.eq.s32.totalorder %s19, 0
      %p39 = por %p37, %p38
      %p40 = scmp.ne.s32.totalorder %s29, %s32
      %p41 = scmp.eq.s32.totalorder %s24, 1
      %p42 = por %p40, %p41
      %p43 = scmp.ne.s32.totalorder %s32, %s33
      %p44 = scmp.eq.s32.totalorder %s24, 0
      %p45 = por %p43, %p44
      %p46 = scmp.ne.s32.totalorder %s32, %s33
      %p47 = scmp.eq.s32.totalorder %s25, 1
      %p48 = por %p46, %p47
      %p50 = scmp.ne.s32.totalorder %s33, %s49
      %p51 = scmp.eq.s32.totalorder %s25, 0
      %p52 = por %p50, %p51
      %s54 = sadd.s32 %s53, 1
      %p57 = scmp.eq.s32.totalorder %s19, 1
      %p58 = scmp.ne.s32.totalorder %s53, %s55
      %p59 = scmp.eq.s32.totalorder %s19, 0
      %p60 = por %p58, %p59
      %p61 = scmp.ne.s32.totalorder %s53, %s55
      %p62 = scmp.eq.s32.totalorder %s24, 1
      %p63 = por %p61, %p62
      %p64 = scmp.ne.s32.totalorder %s55, %s56
      %p65 = scmp.eq.s32.totalorder %s24, 0
      %p66 = por %p64, %p65
      %p67 = scmp.ne.s32.totalorder %s55, %s56
      %p68 = scmp.eq.s32.totalorder %s25, 1
      %p69 = por %p67, %p68
      %p71 = scmp.ne.s32.totalorder %s56, %s70
      %p72 = scmp.eq.s32.totalorder %s25, 0
      %p73 = por %p71, %p72
      %s75 = sadd.s32 %s74, 1
      %p78 = scmp.eq.s32.totalorder %s19, 1
      %p79 = scmp.ne.s32.totalorder %s74, %s76
      %p80 = scmp.eq.s32.totalorder %s19, 0
      %p81 = por %p79, %p80
      %p82 = scmp.ne.s32.totalorder %s74, %s76
      %p83 = scmp.eq.s32.totalorder %s24, 1
      %p84 = por %p82, %p83
      %p85 = scmp.ne.s32.totalorder %s76, %s77
      %p86 = scmp.eq.s32.totalorder %s24, 0
      %p87 = por %p85, %p86
      %p88 = scmp.ne.s32.totalorder %s76, %s77
      %p89 = scmp.eq.s32.totalorder %s25, 1
      %p90 = por %p88, %p89
      %p92 = scmp.ne.s32.totalorder %s77, %s91
      %p93 = scmp.eq.s32.totalorder %s25, 0
      %p94 = por %p92, %p93
      %s96 = sadd.s32 %s95, 1
      %p99 = scmp.eq.s32.totalorder %s19, 1
      %p100 = scmp.ne.s32.totalorder %s95, %s97
      %p101 = scmp.eq.s32.totalorder %s19, 0
      %p102 = por %p100, %p101
      %p103 = scmp.ne.s32.totalorder %s95, %s97
      %p104 = scmp.eq.s32.totalorder %s24, 1
      %p105 = por %p103, %p104
      %p106 = scmp.ne.s32.totalorder %s97, %s98
      %p107 = scmp.eq.s32.totalorder %s24, 0
      %p108 = por %p106, %p107
      %p109 = scmp.ne.s32.totalorder %s97, %s98
      %p110 = scmp.eq.s32.totalorder %s25, 1
      %p111 = por %p109, %p110
      %p113 = scmp.ne.s32.totalorder %s98, %s112
      %p114 = scmp.eq.s32.totalorder %s25, 0
      %p115 = por %p113, %p114
      %s117 = sadd.s32 %s116, 1
      %p120 = scmp.eq.s32.totalorder %s19, 1
      %p121 = scmp.ne.s32.totalorder %s116, %s118
      %p122 = scmp.eq.s32.totalorder %s19, 0
      %p123 = por %p121, %p122
      %p124 = scmp.ne.s32.totalorder %s116, %s118
      %p125 = scmp.eq.s32.totalorder %s24, 1
      %p126 = por %p124, %p125
      %p127 = scmp.ne.s32.totalorder %s118, %s119
      %p128 = scmp.eq.s32.totalorder %s24, 0
      %p129 = por %p127, %p128
      %p130 = scmp.ne.s32.totalorder %s118, %s119
      %p131 = scmp.eq.s32.totalorder %s25, 1
      %p132 = por %p130, %p131
      %p134 = scmp.ne.s32.totalorder %s119, %s133
      %p135 = scmp.eq.s32.totalorder %s25, 0
      %p136 = por %p134, %p135
      %s138 = sadd.s32 %s137, 1
      %p141 = scmp.eq.s32.totalorder %s19, 1
      %p142 = scmp.ne.s32.totalorder %s137, %s139
      %p143 = scmp.eq.s32.totalorder %s19, 0
      %p144 = por %p142, %p143
      %p145 = scmp.ne.s32.totalorder %s137, %s139
      %p146 = scmp.eq.s32.totalorder %s24, 1
      %p147 = por %p145, %p146
      %p148 = scmp.ne.s32.totalorder %s139, %s140
      %p149 = scmp.eq.s32.totalorder %s24, 0
      %p150 = por %p148, %p149
      %p151 = scmp.ne.s32.totalorder %s139, %s140
      %p152 = scmp.eq.s32.totalorder %s25, 1
      %p153 = por %p151, %p152
      %p155 = scmp.ne.s32.totalorder %s140, %s154
      %p156 = scmp.eq.s32.totalorder %s25, 0
      %p157 = por %p155, %p156
      %s158 = ssub.s32 %s19, %s26
      %p159 = scmp.eq.s32.totalorder %s158, 0
      %s161 = sadd.s32 %s160, 1
      %s162 = scalar_select %p159, %s160, %s161
      %p165 = pneg %p159
      %p166 = scmp.eq.s32.totalorder %s19, 1
      %p167 = por %p165, %p166
      %p168 = scmp.ne.s32.totalorder %s160, %s163
      %p169 = scmp.eq.s32.totalorder %s19, 0
      %p170 = por %p168, %p169
      %p171 = scmp.ne.s32.totalorder %s160, %s163
      %p172 = scmp.eq.s32.totalorder %s24, 1
      %p173 = por %p171, %p172
      %p174 = scmp.ne.s32.totalorder %s163, %s164
      %p175 = scmp.eq.s32.totalorder %s24, 0
      %p176 = por %p174, %p175
      %p177 = scmp.ne.s32.totalorder %s163, %s164
      %p178 = scmp.eq.s32.totalorder %s25, 1
      %p179 = por %p177, %p178
      %p181 = scmp.ne.s32.totalorder %s164, %s180
      %p182 = scmp.eq.s32.totalorder %s25, 0
      %p183 = por %p181, %p182
      %s184 = ssub.s32 %s19, %s26
      %p185 = scmp.eq.s32.totalorder %s184, 0
      %s187 = sadd.s32 %s186, 1
      %s188 = scalar_select %p185, %s186, %s187
      %p191 = pneg %p185
      %p192 = scmp.eq.s32.totalorder %s19, 1
      %p193 = por %p191, %p192
      %p194 = scmp.ne.s32.totalorder %s186, %s189
      %p195 = scmp.eq.s32.totalorder %s19, 0
      %p196 = por %p194, %p195
      %p197 = scmp.ne.s32.totalorder %s186, %s189
      %p198 = scmp.eq.s32.totalorder %s24, 1
      %p199 = por %p197, %p198
      %p200 = scmp.ne.s32.totalorder %s189, %s190
      %p201 = scmp.eq.s32.totalorder %s24, 0
      %p202 = por %p200, %p201
      %p203 = scmp.ne.s32.totalorder %s189, %s190
      %p204 = scmp.eq.s32.totalorder %s25, 1
      %p205 = por %p203, %p204
      %p207 = scmp.ne.s32.totalorder %s190, %s206
      %p208 = scmp.eq.s32.totalorder %s25, 0
      %p209 = por %p207, %p208
      %p210 = scmp.le.s32.totalorder 1, %s19
      %p211 = scmp.lt.s32.totalorder %s19, 3
      %p212 = pnand %p210, %p211
      %p213 = pneg %p212
      // Predicated region
      $region9: #{tpu_custom_call.1} parent=5 // pred_check
        _
      $region10: #{tpu_custom_call.1} parent=5 // pred_check_branch
        %215 = sbr.rel (%p212) target = $region12
      $region11: #{tpu_custom_call.1} parent=5 // pred_region
        %s216 = ssub.s32 %s19, 1
        // Predicated region
        $region13: #{tpu_custom_call.1} parent=11 // pred_check
          %p217 = pneg %p66
        $region14: #{tpu_custom_call.1} parent=11 // pred_check_branch
          %219 = sbr.rel (%p217) target = $region16
        $region15: #{tpu_custom_call.1} parent=11 // pred_region
          _
        $region16: #{tpu_custom_call.1} parent=11 // pred_fallthru
          _
        // Predicated region
        $region17: #{tpu_custom_call.1} parent=11 // pred_check
          %p220 = pneg %p87
        $region18: #{tpu_custom_call.1} parent=11 // pred_check_branch
          %222 = sbr.rel (%p220) target = $region20
        $region19: #{tpu_custom_call.1} parent=11 // pred_region
          _
        $region20: #{tpu_custom_call.1} parent=11 // pred_fallthru
          _
        // Predicated region
        $region21: #{tpu_custom_call.1} parent=11 // pred_check
          %p223 = pneg %p108
        $region22: #{tpu_custom_call.1} parent=11 // pred_check_branch
          %225 = sbr.rel (%p223) target = $region24
        $region23: #{tpu_custom_call.1} parent=11 // pred_region
          _
        $region24: #{tpu_custom_call.1} parent=11 // pred_fallthru
          _
        // Predicated region
        $region25: #{tpu_custom_call.1} parent=11 // pred_check
          %p226 = pneg %p129
        $region26: #{tpu_custom_call.1} parent=11 // pred_check_branch
          %228 = sbr.rel (%p226) target = $region28
        $region27: #{tpu_custom_call.1} parent=11 // pred_region
          _
        $region28: #{tpu_custom_call.1} parent=11 // pred_fallthru
          _
        // Predicated region
        $region29: #{tpu_custom_call.1} parent=11 // pred_check
          %p229 = pneg %p150
        $region30: #{tpu_custom_call.1} parent=11 // pred_check_branch
          %231 = sbr.rel (%p229) target = $region32
        $region31: #{tpu_custom_call.1} parent=11 // pred_region
          _
        $region32: #{tpu_custom_call.1} parent=11 // pred_fallthru
          _
      $region12: #{tpu_custom_call.1} parent=5 // pred_fallthru
        _
      %p232 = scmp.lt.s32.totalorder %s19, 2
      // Predicated region
      $region33: #{tpu_custom_call.1} parent=5 // pred_check
        %p233 = pneg %p232
      $region34: #{tpu_custom_call.1} parent=5 // pred_check_branch
        %235 = sbr.rel (%p233) target = $region36
      $region35: #{tpu_custom_call.1} parent=5 // pred_region
        // Predicated region
        $region37: #{tpu_custom_call.1} parent=35 // pred_check
          %p236 = pneg %p39
        $region38: #{tpu_custom_call.1} parent=35 // pred_check_branch
          %238 = sbr.rel (%p236) target = $region40
        $region39: #{tpu_custom_call.1} parent=35 // pred_region
          %s239 = smul.u32 8, %s19
          %p240 = scmp.lt.s32.totalorder %s239, 15
          %s241 = scalar_select %p240, %s239, 15
          %s242 = smul.addr %s241, 8
          %s243 = scalar_lea.vmem %s0, %s242
          %s244 = smul.u32 8, %s19
        $region40: #{tpu_custom_call.1} parent=35 // pred_fallthru
          _
      $region36: #{tpu_custom_call.1} parent=5 // pred_fallthru
        _
      %p245 = scmp.le.s32.totalorder 1, %s19
      %p246 = scmp.lt.s32.totalorder %s19, 3
      %p247 = pnand %p245, %p246
      %p248 = pneg %p247
      // Predicated region
      $region41: #{tpu_custom_call.1} parent=5 // pred_check
        _
      $region42: #{tpu_custom_call.1} parent=5 // pred_check_branch
        %250 = sbr.rel (%p247) target = $region44
      $region43: #{tpu_custom_call.1} parent=5 // pred_region
        %s251 = ssub.s32 %s19, 1
        %s252 = smul.u32 8, %s24
        %p253 = scmp.lt.s32.totalorder %s252, 15
        %s254 = scalar_select %p253, %s252, 15
        %s255 = smul.addr %s254, 8
        %s256 = scalar_lea.vmem %s0, %s255
        %p257 = pneg %p45
        %p258 = pneg %p42
        %p259 = pneg %p66
        %p260 = pneg %p63
        %p261 = pneg %p87
        %p262 = pneg %p84
        %p263 = pneg %p108
        %p264 = pneg %p105
        %p265 = pneg %p129
        %p266 = pneg %p126
        %p267 = pneg %p150
        %p268 = pneg %p147
        %p269 = pneg %p176
        %p270 = pneg %p173
        %p271 = scmp.lt.s32.totalorder %s24, 1
        %s272 = scalar_select %p271, %s24, 1
        %s273 = smul.addr %s272, 8
        %s274 = scalar_lea.vmem %s6, %s273
        %p275 = pneg %p202
        %p276 = pneg %p199
        %s277 = sand.u32 %s189, 1
        %s278 = scalar_lea.sflag [#allocation5], %s277
        %s279 = sand.u32 %s189, 1
        %s280 = smul.addr %s279, 64
        %s281 = scalar_lea.vmem [#allocation4], %s280
        %s282 = smul.u32 8, %s24
        %p283 = scmp.lt.s32.totalorder %s282, 15
        %s284 = scalar_select %p283, %s282, 15
        %s285 = smul.addr %s284, 8
        %s286 = scalar_lea.vmem %s0, %s285
        %s287 = smul.u32 8, %s24
        %p288 = scmp.lt.s32.totalorder %s24, 1
        %s289 = scalar_select %p288, %s24, 1
        %s290 = smul.addr %s289, 8
        %s291 = scalar_lea.vmem %s6, %s290
        %s292 = smul.u32 8, %s24
        %p293 = scmp.eq.s32.totalorder %s24, 0
        // Predicated region
        $region45: #{tpu_custom_call.1} parent=43 // pred_check
          %p294 = pneg %p293
        $region46: #{tpu_custom_call.1} parent=43 // pred_check_branch
          %296 = sbr.rel (%p294) target = $region48
        $region47: #{tpu_custom_call.1} parent=43 // pred_region
          %vm297 = vcmask 261120
          %298 = vst.msk [vmem:[#allocation2] sm:$0xff] %vm297, 0.0
        $region48: #{tpu_custom_call.1} parent=43 // pred_fallthru
          _
        %v299 = vld [vmem:[%s1] sm:$0x1]
        %v300 = vld [vmem:[%s2] sm:$0x1]
        %v301 = vld [vmem:[%s3] sm:$0xff]
        %v302 = vld [vmem:[%s3 + $0x8] sm:$0xff]
        %v303 = vld [vmem:[%s3 + $0x10] sm:$0xff]
        %v304 = vld [vmem:[%s3 + $0x18] sm:$0xff]
        %v305 = vld [vmem:[%s286] sm:$0xff]
        %v306 = vld [vmem:[%s286 + $0x8] sm:$0xff]
        %v307 = vld [vmem:[%s286 + $0x10] sm:$0xff]
        %v308 = vld [vmem:[%s286 + $0x18] sm:$0xff]
        %v309 = vld [vmem:[%s286 + $0x20] sm:$0xff]
        %v310 = vld [vmem:[%s286 + $0x28] sm:$0xff]
        %v311 = vld [vmem:[%s286 + $0x30] sm:$0xff]
        %v312 = vld [vmem:[%s286 + $0x38] sm:$0xff]
        %314 = vset.pattern.permute.xlu0 0
        %315 = vperm.xlu0 %314, %v305
        %v316 = vpop.permute.xlu0 %315
        %319 = vset.pattern.permute.xlu0 0
        %320 = vperm.xlu0 %319, %v306
        %v321 = vpop.permute.xlu0 %320
        %324 = vset.pattern.permute.xlu0 0
        %325 = vperm.xlu0 %324, %v307
        %v326 = vpop.permute.xlu0 %325
        %329 = vset.pattern.permute.xlu0 0
        %330 = vperm.xlu0 %329, %v308
        %v331 = vpop.permute.xlu0 %330
        %334 = vset.pattern.permute.xlu0 0
        %335 = vperm.xlu0 %334, %v309
        %v336 = vpop.permute.xlu0 %335
        %339 = vset.pattern.permute.xlu0 0
        %340 = vperm.xlu0 %339, %v310
        %v341 = vpop.permute.xlu0 %340
        %344 = vset.pattern.permute.xlu0 0
        %345 = vperm.xlu0 %344, %v311
        %v346 = vpop.permute.xlu0 %345
        %349 = vset.pattern.permute.xlu0 0
        %350 = vperm.xlu0 %349, %v312
        %v351 = vpop.permute.xlu0 %350
        %v354 = vlaneseq
        %v355 = vshrl.u32 %v354, 7
        %v356 = vsub.s32 0, %v355
        %v357 = vrot.slane %v299, %v356
        %v359 = vmul.f32 %v316, %v357
        %v360 = vmul.f32 %v321, %v357
        %v361 = vmul.f32 %v326, %v357
        %v362 = vmul.f32 %v331, %v357
        %v363 = vmul.f32 %v336, %v357
        %v364 = vmul.f32 %v341, %v357
        %v365 = vmul.f32 %v346, %v357
        %v366 = vmul.f32 %v351, %v357
        %v368 = vlaneseq
        %v369 = vshrl.u32 %v368, 7
        %v370 = vsub.s32 0, %v369
        %v371 = vrot.slane %v300, %v370
        %v373 = vadd.f32 %v359, %v371
        %v374 = vadd.f32 %v360, %v371
        %v375 = vadd.f32 %v361, %v371
        %v376 = vadd.f32 %v362, %v371
        %v377 = vadd.f32 %v363, %v371
        %v378 = vadd.f32 %v364, %v371
        %v379 = vadd.f32 %v365, %v371
        %v380 = vadd.f32 %v366, %v371
        %vm381 = vcmask 261120
        %382 = vst.msk [vmem:[%s281] sm:$0xff] %vm381, %v373
        %383 = vst.msk [vmem:[%s281 + $0x8] sm:$0xff] %vm381, %v374
        %384 = vst.msk [vmem:[%s281 + $0x10] sm:$0xff] %vm381, %v375
        %385 = vst.msk [vmem:[%s281 + $0x18] sm:$0xff] %vm381, %v376
        %386 = vst.msk [vmem:[%s281 + $0x20] sm:$0xff] %vm381, %v377
        %387 = vst.msk [vmem:[%s281 + $0x28] sm:$0xff] %vm381, %v378
        %388 = vst.msk [vmem:[%s281 + $0x30] sm:$0xff] %vm381, %v379
        %389 = vst.msk [vmem:[%s281 + $0x38] sm:$0xff] %vm381, %v380
        %v390 = vld [vmem:[#allocation2] sm:$0xff]
        %v391 = vld [vmem:[%s281] sm:$0xff]
        %v393 = vsel %vm381, %v390, 0
        %395 = vmatprep.subr.mxu0 0.0
        %396 = vmatpush1.msra.mxu0 %v301
        %397 = vmatprep.subr.mxu0 0.0
        %398 = vmatpush1.msra.mxu0 %v302
        %399 = vmatprep.subr.mxu0 0.0
        %400 = vmatpush1.msra.mxu0 %v303
        %401 = vmatprep.subr.mxu0 0.0
        %402 = vmatpush1.msra.mxu0 %v304
        %403 = vmatprep.subr.mxu0 0.0
        %404 = vmatpush1.msra.mxu0 0.0
        %405 = vmatprep.subr.mxu0 0.0
        %406 = vmatpush1.msra.mxu0 0.0
        %407 = vmatprep.subr.mxu0 0.0
        %408 = vmatpush1.msra.mxu0 0.0
        %409 = vmatprep.subr.mxu0 0.0
        %410 = vmatpush1.msra.mxu0 0.0
        %411 = vmatprep.subr.mxu0 0.0
        %412 = vmatpush1.msra.mxu0 0.0
        %413 = vmatprep.subr.mxu0 0.0
        %414 = vmatpush1.msra.mxu0 0.0
        %415 = vmatprep.subr.mxu0 0.0
        %416 = vmatpush1.msra.mxu0 0.0
        %417 = vmatprep.subr.mxu0 0.0
        %418 = vmatpush1.msra.mxu0 0.0
        %419 = vmatprep.subr.mxu0 0.0
        %420 = vmatpush1.msra.mxu0 0.0
        %421 = vmatprep.subr.mxu0 0.0
        %422 = vmatpush1.msra.mxu0 0.0
        %423 = vmatprep.subr.mxu0 0.0
        %424 = vmatpush1.msra.mxu0 0.0
        %425 = vmatprep.subr.mxu0 0.0
        %426 = vmatpush1.msra.mxu0 0.0
        %427 = vmatprep.subr.mxu0 0.0
        %428 = vmatpush1.msra.mxu0 0.0
        %429 = vmatprep.subr.mxu0 0.0
        %430 = vmatpush1.msra.mxu0 0.0
        %431 = vmatprep.subr.mxu0 0.0
        %432 = vmatpush1.msra.mxu0 0.0
        %433 = vmatprep.subr.mxu0 0.0
        %434 = vmatpush1.msra.mxu0 0.0
        %435 = vmatprep.subr.mxu0 0.0
        %436 = vmatpush1.msra.mxu0 0.0
        %437 = vmatprep.subr.mxu0 0.0
        %438 = vmatpush1.msra.mxu0 0.0
        %439 = vmatprep.subr.mxu0 0.0
        %440 = vmatpush1.msra.mxu0 0.0
        %441 = vmatprep.subr.mxu0 0.0
        %442 = vmatpush1.msra.mxu0 0.0
        %443 = vmatprep.subr.mxu0 0.0
        %444 = vmatpush1.msra.mxu0 0.0
        %445 = vmatprep.subr.mxu0 0.0
        %446 = vmatpush1.msra.mxu0 0.0
        %447 = vmatprep.subr.mxu0 0.0
        %448 = vmatpush1.msra.mxu0 0.0
        %449 = vmatprep.subr.mxu0 0.0
        %450 = vmatpush1.msra.mxu0 0.0
        %451 = vmatprep.subr.mxu0 0.0
        %452 = vmatpush1.msra.mxu0 0.0
        %453 = vmatprep.subr.mxu0 0.0
        %454 = vmatpush1.msra.mxu0 0.0
        %455 = vmatprep.subr.mxu0 0.0
        %456 = vmatpush1.msra.mxu0 0.0
        %457 = vmatprep.subr.mxu0 0.0
        %458 = vmatpush1.msra.mxu0 0.0
        %459 = vmatprep.mubr.f32.mxu0 0.0
        %460 = vmatmul.mubr.f32.gmra.mrb[0].mxu0 %v393
        %v461 = vpop.f32.mrb[0].mxu0
        %v462 = vadd.f32 0.0, %v461
        %v463 = vpop.f32.mrb[0].mxu0
        %464 = vdwg.mxu0
        %v465 = vadd.f32 %v391, %v462
        %466 = vst.msk [vmem:[%s281] sm:$0xff] %vm381, %v465
        %s467 = scalar_lea.vmem %s281, 8 [#allocation4]
        %v468 = vld [vmem:[%s467] sm:$0xff]
        %v470 = vsel %vm381, %v465, 0
        %472 = vmatprep.subr.mxu0 0.0
        %473 = vmatpush1.msra.mxu0 %v301
        %474 = vmatprep.subr.mxu0 0.0
        %475 = vmatpush1.msra.mxu0 %v302
        %476 = vmatprep.subr.mxu0 0.0
        %477 = vmatpush1.msra.mxu0 %v303
        %478 = vmatprep.subr.mxu0 0.0
        %479 = vmatpush1.msra.mxu0 %v304
        %480 = vmatprep.subr.mxu0 0.0
        %481 = vmatpush1.msra.mxu0 0.0
        %482 = vmatprep.subr.mxu0 0.0
        %483 = vmatpush1.msra.mxu0 0.0
        %484 = vmatprep.subr.mxu0 0.0
        %485 = vmatpush1.msra.mxu0 0.0
        %486 = vmatprep.subr.mxu0 0.0
        %487 = vmatpush1.msra.mxu0 0.0
        %488 = vmatprep.subr.mxu0 0.0
        %489 = vmatpush1.msra.mxu0 0.0
        %490 = vmatprep.subr.mxu0 0.0
        %491 = vmatpush1.msra.mxu0 0.0
        %492 = vmatprep.subr.mxu0 0.0
        %493 = vmatpush1.msra.mxu0 0.0
        %494 = vmatprep.subr.mxu0 0.0
        %495 = vmatpush1.msra.mxu0 0.0
        %496 = vmatprep.subr.mxu0 0.0
        %497 = vmatpush1.msra.mxu0 0.0
        %498 = vmatprep.subr.mxu0 0.0
        %499 = vmatpush1.msra.mxu0 0.0
        %500 = vmatprep.subr.mxu0 0.0
        %501 = vmatpush1.msra.mxu0 0.0
        %502 = vmatprep.subr.mxu0 0.0
        %503 = vmatpush1.msra.mxu0 0.0
        %504 = vmatprep.subr.mxu0 0.0
        %505 = vmatpush1.msra.mxu0 0.0
        %506 = vmatprep.subr.mxu0 0.0
        %507 = vmatpush1.msra.mxu0 0.0
        %508 = vmatprep.subr.mxu0 0.0
        %509 = vmatpush1.msra.mxu0 0.0
        %510 = vmatprep.subr.mxu0 0.0
        %511 = vmatpush1.msra.mxu0 0.0
        %512 = vmatprep.subr.mxu0 0.0
        %513 = vmatpush1.msra.mxu0 0.0
        %514 = vmatprep.subr.mxu0 0.0
        %515 = vmatpush1.msra.mxu0 0.0
        %516 = vmatprep.subr.mxu0 0.0
        %517 = vmatpush1.msra.mxu0 0.0
        %518 = vmatprep.subr.mxu0 0.0
        %519 = vmatpush1.msra.mxu0 0.0
        %520 = vmatprep.subr.mxu0 0.0
        %521 = vmatpush1.msra.mxu0 0.0
        %522 = vmatprep.subr.mxu0 0.0
        %523 = vmatpush1.msra.mxu0 0.0
        %524 = vmatprep.subr.mxu0 0.0
        %525 = vmatpush1.msra.mxu0 0.0
        %526 = vmatprep.subr.mxu0 0.0
        %527 = vmatpush1.msra.mxu0 0.0
        %528 = vmatprep.subr.mxu0 0.0
        %529 = vmatpush1.msra.mxu0 0.0
        %530 = vmatprep.subr.mxu0 0.0
        %531 = vmatpush1.msra.mxu0 0.0
        %532 = vmatprep.subr.mxu0 0.0
        %533 = vmatpush1.msra.mxu0 0.0
        %534 = vmatprep.subr.mxu0 0.0
        %535 = vmatpush1.msra.mxu0 0.0
        %536 = vmatprep.mubr.f32.mxu0 0.0
        %537 = vmatmul.mubr.f32.gmra.mrb[0].mxu0 %v470
        %v538 = vpop.f32.mrb[0].mxu0
        %v539 = vadd.f32 0.0, %v538
        %v540 = vpop.f32.mrb[0].mxu0
        %541 = vdwg.mxu0
        %v542 = vadd.f32 %v468, %v539
        %543 = vst.msk [vmem:[%s467] sm:$0xff] %vm381, %v542
        %s544 = scalar_lea.vmem %s281, 16 [#allocation4]
        %v545 = vld [vmem:[%s544] sm:$0xff]
        %v547 = vsel %vm381, %v542, 0
        %549 = vmatprep.subr.mxu0 0.0
        %550 = vmatpush1.msra.mxu0 %v301
        %551 = vmatprep.subr.mxu0 0.0
        %552 = vmatpush1.msra.mxu0 %v302
        %553 = vmatprep.subr.mxu0 0.0
        %554 = vmatpush1.msra.mxu0 %v303
        %555 = vmatprep.subr.mxu0 0.0
        %556 = vmatpush1.msra.mxu0 %v304
        %557 = vmatprep.subr.mxu0 0.0
        %558 = vmatpush1.msra.mxu0 0.0
        %559 = vmatprep.subr.mxu0 0.0
        %560 = vmatpush1.msra.mxu0 0.0
        %561 = vmatprep.subr.mxu0 0.0
        %562 = vmatpush1.msra.mxu0 0.0
        %563 = vmatprep.subr.mxu0 0.0
        %564 = vmatpush1.msra.mxu0 0.0
        %565 = vmatprep.subr.mxu0 0.0
        %566 = vmatpush1.msra.mxu0 0.0
        %567 = vmatprep.subr.mxu0 0.0
        %568 = vmatpush1.msra.mxu0 0.0
        %569 = vmatprep.subr.mxu0 0.0
        %570 = vmatpush1.msra.mxu0 0.0
        %571 = vmatprep.subr.mxu0 0.0
        %572 = vmatpush1.msra.mxu0 0.0
        %573 = vmatprep.subr.mxu0 0.0
        %574 = vmatpush1.msra.mxu0 0.0
        %575 = vmatprep.subr.mxu0 0.0
        %576 = vmatpush1.msra.mxu0 0.0
        %577 = vmatprep.subr.mxu0 0.0
        %578 = vmatpush1.msra.mxu0 0.0
        %579 = vmatprep.subr.mxu0 0.0
        %580 = vmatpush1.msra.mxu0 0.0
        %581 = vmatprep.subr.mxu0 0.0
        %582 = vmatpush1.msra.mxu0 0.0
        %583 = vmatprep.subr.mxu0 0.0
        %584 = vmatpush1.msra.mxu0 0.0
        %585 = vmatprep.subr.mxu0 0.0
        %586 = vmatpush1.msra.mxu0 0.0
        %587 = vmatprep.subr.mxu0 0.0
        %588 = vmatpush1.msra.mxu0 0.0
        %589 = vmatprep.subr.mxu0 0.0
        %590 = vmatpush1.msra.mxu0 0.0
        %591 = vmatprep.subr.mxu0 0.0
        %592 = vmatpush1.msra.mxu0 0.0
        %593 = vmatprep.subr.mxu0 0.0
        %594 = vmatpush1.msra.mxu0 0.0
        %595 = vmatprep.subr.mxu0 0.0
        %596 = vmatpush1.msra.mxu0 0.0
        %597 = vmatprep.subr.mxu0 0.0
        %598 = vmatpush1.msra.mxu0 0.0
        %599 = vmatprep.subr.mxu0 0.0
        %600 = vmatpush1.msra.mxu0 0.0
        %601 = vmatprep.subr.mxu0 0.0
        %602 = vmatpush1.msra.mxu0 0.0
        %603 = vmatprep.subr.mxu0 0.0
        %604 = vmatpush1.msra.mxu0 0.0
        %605 = vmatprep.subr.mxu0 0.0
        %606 = vmatpush1.msra.mxu0 0.0
        %607 = vmatprep.subr.mxu0 0.0
        %608 = vmatpush1.msra.mxu0 0.0
        %609 = vmatprep.subr.mxu0 0.0
        %610 = vmatpush1.msra.mxu0 0.0
        %611 = vmatprep.subr.mxu0 0.0
        %612 = vmatpush1.msra.mxu0 0.0
        %613 = vmatprep.mubr.f32.mxu0 0.0
        %614 = vmatmul.mubr.f32.gmra.mrb[0].mxu0 %v547
        %v615 = vpop.f32.mrb[0].mxu0
        %v616 = vadd.f32 0.0, %v615
        %v617 = vpop.f32.mrb[0].mxu0
        %618 = vdwg.mxu0
        %v619 = vadd.f32 %v545, %v616
        %620 = vst.msk [vmem:[%s544] sm:$0xff] %vm381, %v619
        %s621 = scalar_lea.vmem %s281, 24 [#allocation4]
        %v622 = vld [vmem:[%s621] sm:$0xff]
        %v624 = vsel %vm381, %v619, 0
        %626 = vmatprep.subr.mxu0 0.0
        %627 = vmatpush1.msra.mxu0 %v301
        %628 = vmatprep.subr.mxu0 0.0
        %629 = vmatpush1.msra.mxu0 %v302
        %630 = vmatprep.subr.mxu0 0.0
        %631 = vmatpush1.msra.mxu0 %v303
        %632 = vmatprep.subr.mxu0 0.0
        %633 = vmatpush1.msra.mxu0 %v304
        %634 = vmatprep.subr.mxu0 0.0
        %635 = vmatpush1.msra.mxu0 0.0
        %636 = vmatprep.subr.mxu0 0.0
        %637 = vmatpush1.msra.mxu0 0.0
        %638 = vmatprep.subr.mxu0 0.0
        %639 = vmatpush1.msra.mxu0 0.0
        %640 = vmatprep.subr.mxu0 0.0
        %641 = vmatpush1.msra.mxu0 0.0
        %642 = vmatprep.subr.mxu0 0.0
        %643 = vmatpush1.msra.mxu0 0.0
        %644 = vmatprep.subr.mxu0 0.0
        %645 = vmatpush1.msra.mxu0 0.0
        %646 = vmatprep.subr.mxu0 0.0
        %647 = vmatpush1.msra.mxu0 0.0
        %648 = vmatprep.subr.mxu0 0.0
        %649 = vmatpush1.msra.mxu0 0.0
        %650 = vmatprep.subr.mxu0 0.0
        %651 = vmatpush1.msra.mxu0 0.0
        %652 = vmatprep.subr.mxu0 0.0
        %653 = vmatpush1.msra.mxu0 0.0
        %654 = vmatprep.subr.mxu0 0.0
        %655 = vmatpush1.msra.mxu0 0.0
        %656 = vmatprep.subr.mxu0 0.0
        %657 = vmatpush1.msra.mxu0 0.0
        %658 = vmatprep.subr.mxu0 0.0
        %659 = vmatpush1.msra.mxu0 0.0
        %660 = vmatprep.subr.mxu0 0.0
        %661 = vmatpush1.msra.mxu0 0.0
        %662 = vmatprep.subr.mxu0 0.0
        %663 = vmatpush1.msra.mxu0 0.0
        %664 = vmatprep.subr.mxu0 0.0
        %665 = vmatpush1.msra.mxu0 0.0
        %666 = vmatprep.subr.mxu0 0.0
        %667 = vmatpush1.msra.mxu0 0.0
        %668 = vmatprep.subr.mxu0 0.0
        %669 = vmatpush1.msra.mxu0 0.0
        %670 = vmatprep.subr.mxu0 0.0
        %671 = vmatpush1.msra.mxu0 0.0
        %672 = vmatprep.subr.mxu0 0.0
        %673 = vmatpush1.msra.mxu0 0.0
        %674 = vmatprep.subr.mxu0 0.0
        %675 = vmatpush1.msra.mxu0 0.0
        %676 = vmatprep.subr.mxu0 0.0
        %677 = vmatpush1.msra.mxu0 0.0
        %678 = vmatprep.subr.mxu0 0.0
        %679 = vmatpush1.msra.mxu0 0.0
        %680 = vmatprep.subr.mxu0 0.0
        %681 = vmatpush1.msra.mxu0 0.0
        %682 = vmatprep.subr.mxu0 0.0
        %683 = vmatpush1.msra.mxu0 0.0
        %684 = vmatprep.subr.mxu0 0.0
        %685 = vmatpush1.msra.mxu0 0.0
        %686 = vmatprep.subr.mxu0 0.0
        %687 = vmatpush1.msra.mxu0 0.0
        %688 = vmatprep.subr.mxu0 0.0
        %689 = vmatpush1.msra.mxu0 0.0
        %690 = vmatprep.mubr.f32.mxu0 0.0
        %691 = vmatmul.mubr.f32.gmra.mrb[0].mxu0 %v624
        %v692 = vpop.f32.mrb[0].mxu0
        %v693 = vadd.f32 0.0, %v692
        %v694 = vpop.f32.mrb[0].mxu0
        %695 = vdwg.mxu0
        %v696 = vadd.f32 %v622, %v693
        %697 = vst.msk [vmem:[%s621] sm:$0xff] %vm381, %v696
        %s698 = scalar_lea.vmem %s281, 32 [#allocation4]
        %v699 = vld [vmem:[%s698] sm:$0xff]
        %v701 = vsel %vm381, %v696, 0
        %703 = vmatprep.subr.mxu0 0.0
        %704 = vmatpush1.msra.mxu0 %v301
        %705 = vmatprep.subr.mxu0 0.0
        %706 = vmatpush1.msra.mxu0 %v302
        %707 = vmatprep.subr.mxu0 0.0
        %708 = vmatpush1.msra.mxu0 %v303
        %709 = vmatprep.subr.mxu0 0.0
        %710 = vmatpush1.msra.mxu0 %v304
        %711 = vmatprep.subr.mxu0 0.0
        %712 = vmatpush1.msra.mxu0 0.0
        %713 = vmatprep.subr.mxu0 0.0
        %714 = vmatpush1.msra.mxu0 0.0
        %715 = vmatprep.subr.mxu0 0.0
        %716 = vmatpush1.msra.mxu0 0.0
        %717 = vmatprep.subr.mxu0 0.0
        %718 = vmatpush1.msra.mxu0 0.0
        %719 = vmatprep.subr.mxu0 0.0
        %720 = vmatpush1.msra.mxu0 0.0
        %721 = vmatprep.subr.mxu0 0.0
        %722 = vmatpush1.msra.mxu0 0.0
        %723 = vmatprep.subr.mxu0 0.0
        %724 = vmatpush1.msra.mxu0 0.0
        %725 = vmatprep.subr.mxu0 0.0
        %726 = vmatpush1.msra.mxu0 0.0
        %727 = vmatprep.subr.mxu0 0.0
        %728 = vmatpush1.msra.mxu0 0.0
        %729 = vmatprep.subr.mxu0 0.0
        %730 = vmatpush1.msra.mxu0 0.0
        %731 = vmatprep.subr.mxu0 0.0
        %732 = vmatpush1.msra.mxu0 0.0
        %733 = vmatprep.subr.mxu0 0.0
        %734 = vmatpush1.msra.mxu0 0.0
        %735 = vmatprep.subr.mxu0 0.0
        %736 = vmatpush1.msra.mxu0 0.0
        %737 = vmatprep.subr.mxu0 0.0
        %738 = vmatpush1.msra.mxu0 0.0
        %739 = vmatprep.subr.mxu0 0.0
        %740 = vmatpush1.msra.mxu0 0.0
        %741 = vmatprep.subr.mxu0 0.0
        %742 = vmatpush1.msra.mxu0 0.0
        %743 = vmatprep.subr.mxu0 0.0
        %744 = vmatpush1.msra.mxu0 0.0
        %745 = vmatprep.subr.mxu0 0.0
        %746 = vmatpush1.msra.mxu0 0.0
        %747 = vmatprep.subr.mxu0 0.0
        %748 = vmatpush1.msra.mxu0 0.0
        %749 = vmatprep.subr.mxu0 0.0
        %750 = vmatpush1.msra.mxu0 0.0
        %751 = vmatprep.subr.mxu0 0.0
        %752 = vmatpush1.msra.mxu0 0.0
        %753 = vmatprep.subr.mxu0 0.0
        %754 = vmatpush1.msra.mxu0 0.0
        %755 = vmatprep.subr.mxu0 0.0
        %756 = vmatpush1.msra.mxu0 0.0
        %757 = vmatprep.subr.mxu0 0.0
        %758 = vmatpush1.msra.mxu0 0.0
        %759 = vmatprep.subr.mxu0 0.0
        %760 = vmatpush1.msra.mxu0 0.0
        %761 = vmatprep.subr.mxu0 0.0
        %762 = vmatpush1.msra.mxu0 0.0
        %763 = vmatprep.subr.mxu0 0.0
        %764 = vmatpush1.msra.mxu0 0.0
        %765 = vmatprep.subr.mxu0 0.0
        %766 = vmatpush1.msra.mxu0 0.0
        %767 = vmatprep.mubr.f32.mxu0 0.0
        %768 = vmatmul.mubr.f32.gmra.mrb[0].mxu0 %v701
        %v769 = vpop.f32.mrb[0].mxu0
        %v770 = vadd.f32 0.0, %v769
        %v771 = vpop.f32.mrb[0].mxu0
        %772 = vdwg.mxu0
        %v773 = vadd.f32 %v699, %v770
        %774 = vst.msk [vmem:[%s698] sm:$0xff] %vm381, %v773
        %s775 = scalar_lea.vmem %s281, 40 [#allocation4]
        %v776 = vld [vmem:[%s775] sm:$0xff]
        %v778 = vsel %vm381, %v773, 0
        %780 = vmatprep.subr.mxu0 0.0
        %781 = vmatpush1.msra.mxu0 %v301
        %782 = vmatprep.subr.mxu0 0.0
        %783 = vmatpush1.msra.mxu0 %v302
        %784 = vmatprep.subr.mxu0 0.0
        %785 = vmatpush1.msra.mxu0 %v303
        %786 = vmatprep.subr.mxu0 0.0
        %787 = vmatpush1.msra.mxu0 %v304
        %788 = vmatprep.subr.mxu0 0.0
        %789 = vmatpush1.msra.mxu0 0.0
        %790 = vmatprep.subr.mxu0 0.0
        %791 = vmatpush1.msra.mxu0 0.0
        %792 = vmatprep.subr.mxu0 0.0
        %793 = vmatpush1.msra.mxu0 0.0
        %794 = vmatprep.subr.mxu0 0.0
        %795 = vmatpush1.msra.mxu0 0.0
        %796 = vmatprep.subr.mxu0 0.0
        %797 = vmatpush1.msra.mxu0 0.0
        %798 = vmatprep.subr.mxu0 0.0
        %799 = vmatpush1.msra.mxu0 0.0
        %800 = vmatprep.subr.mxu0 0.0
        %801 = vmatpush1.msra.mxu0 0.0
        %802 = vmatprep.subr.mxu0 0.0
        %803 = vmatpush1.msra.mxu0 0.0
        %804 = vmatprep.subr.mxu0 0.0
        %805 = vmatpush1.msra.mxu0 0.0
        %806 = vmatprep.subr.mxu0 0.0
        %807 = vmatpush1.msra.mxu0 0.0
        %808 = vmatprep.subr.mxu0 0.0
        %809 = vmatpush1.msra.mxu0 0.0
        %810 = vmatprep.subr.mxu0 0.0
        %811 = vmatpush1.msra.mxu0 0.0
        %812 = vmatprep.subr.mxu0 0.0
        %813 = vmatpush1.msra.mxu0 0.0
        %814 = vmatprep.subr.mxu0 0.0
        %815 = vmatpush1.msra.mxu0 0.0
        %816 = vmatprep.subr.mxu0 0.0
        %817 = vmatpush1.msra.mxu0 0.0
        %818 = vmatprep.subr.mxu0 0.0
        %819 = vmatpush1.msra.mxu0 0.0
        %820 = vmatprep.subr.mxu0 0.0
        %821 = vmatpush1.msra.mxu0 0.0
        %822 = vmatprep.subr.mxu0 0.0
        %823 = vmatpush1.msra.mxu0 0.0
        %824 = vmatprep.subr.mxu0 0.0
        %825 = vmatpush1.msra.mxu0 0.0
        %826 = vmatprep.subr.mxu0 0.0
        %827 = vmatpush1.msra.mxu0 0.0
        %828 = vmatprep.subr.mxu0 0.0
        %829 = vmatpush1.msra.mxu0 0.0
        %830 = vmatprep.subr.mxu0 0.0
        %831 = vmatpush1.msra.mxu0 0.0
        %832 = vmatprep.subr.mxu0 0.0
        %833 = vmatpush1.msra.mxu0 0.0
        %834 = vmatprep.subr.mxu0 0.0
        %835 = vmatpush1.msra.mxu0 0.0
        %836 = vmatprep.subr.mxu0 0.0
        %837 = vmatpush1.msra.mxu0 0.0
        %838 = vmatprep.subr.mxu0 0.0
        %839 = vmatpush1.msra.mxu0 0.0
        %840 = vmatprep.subr.mxu0 0.0
        %841 = vmatpush1.msra.mxu0 0.0
        %842 = vmatprep.subr.mxu0 0.0
        %843 = vmatpush1.msra.mxu0 0.0
        %844 = vmatprep.mubr.f32.mxu0 0.0
        %845 = vmatmul.mubr.f32.gmra.mrb[0].mxu0 %v778
        %v846 = vpop.f32.mrb[0].mxu0
        %v847 = vadd.f32 0.0, %v846
        %v848 = vpop.f32.mrb[0].mxu0
        %849 = vdwg.mxu0
        %v850 = vadd.f32 %v776, %v847
        %851 = vst.msk [vmem:[%s775] sm:$0xff] %vm381, %v850
        %s852 = scalar_lea.vmem %s281, 48 [#allocation4]
        %v853 = vld [vmem:[%s852] sm:$0xff]
        %v855 = vsel %vm381, %v850, 0
        %857 = vmatprep.subr.mxu0 0.0
        %858 = vmatpush1.msra.mxu0 %v301
        %859 = vmatprep.subr.mxu0 0.0
        %860 = vmatpush1.msra.mxu0 %v302
        %861 = vmatprep.subr.mxu0 0.0
        %862 = vmatpush1.msra.mxu0 %v303
        %863 = vmatprep.subr.mxu0 0.0
        %864 = vmatpush1.msra.mxu0 %v304
        %865 = vmatprep.subr.mxu0 0.0
        %866 = vmatpush1.msra.mxu0 0.0
        %867 = vmatprep.subr.mxu0 0.0
        %868 = vmatpush1.msra.mxu0 0.0
        %869 = vmatprep.subr.mxu0 0.0
        %870 = vmatpush1.msra.mxu0 0.0
        %871 = vmatprep.subr.mxu0 0.0
        %872 = vmatpush1.msra.mxu0 0.0
        %873 = vmatprep.subr.mxu0 0.0
        %874 = vmatpush1.msra.mxu0 0.0
        %875 = vmatprep.subr.mxu0 0.0
        %876 = vmatpush1.msra.mxu0 0.0
        %877 = vmatprep.subr.mxu0 0.0
        %878 = vmatpush1.msra.mxu0 0.0
        %879 = vmatprep.subr.mxu0 0.0
        %880 = vmatpush1.msra.mxu0 0.0
        %881 = vmatprep.subr.mxu0 0.0
        %882 = vmatpush1.msra.mxu0 0.0
        %883 = vmatprep.subr.mxu0 0.0
        %884 = vmatpush1.msra.mxu0 0.0
        %885 = vmatprep.subr.mxu0 0.0
        %886 = vmatpush1.msra.mxu0 0.0
        %887 = vmatprep.subr.mxu0 0.0
        %888 = vmatpush1.msra.mxu0 0.0
        %889 = vmatprep.subr.mxu0 0.0
        %890 = vmatpush1.msra.mxu0 0.0
        %891 = vmatprep.subr.mxu0 0.0
        %892 = vmatpush1.msra.mxu0 0.0
        %893 = vmatprep.subr.mxu0 0.0
        %894 = vmatpush1.msra.mxu0 0.0
        %895 = vmatprep.subr.mxu0 0.0
        %896 = vmatpush1.msra.mxu0 0.0
        %897 = vmatprep.subr.mxu0 0.0
        %898 = vmatpush1.msra.mxu0 0.0
        %899 = vmatprep.subr.mxu0 0.0
        %900 = vmatpush1.msra.mxu0 0.0
        %901 = vmatprep.subr.mxu0 0.0
        %902 = vmatpush1.msra.mxu0 0.0
        %903 = vmatprep.subr.mxu0 0.0
        %904 = vmatpush1.msra.mxu0 0.0
        %905 = vmatprep.subr.mxu0 0.0
        %906 = vmatpush1.msra.mxu0 0.0
        %907 = vmatprep.subr.mxu0 0.0
        %908 = vmatpush1.msra.mxu0 0.0
        %909 = vmatprep.subr.mxu0 0.0
        %910 = vmatpush1.msra.mxu0 0.0
        %911 = vmatprep.subr.mxu0 0.0
        %912 = vmatpush1.msra.mxu0 0.0
        %913 = vmatprep.subr.mxu0 0.0
        %914 = vmatpush1.msra.mxu0 0.0
        %915 = vmatprep.subr.mxu0 0.0
        %916 = vmatpush1.msra.mxu0 0.0
        %917 = vmatprep.subr.mxu0 0.0
        %918 = vmatpush1.msra.mxu0 0.0
        %919 = vmatprep.subr.mxu0 0.0
        %920 = vmatpush1.msra.mxu0 0.0
        %921 = vmatprep.mubr.f32.mxu0 0.0
        %922 = vmatmul.mubr.f32.gmra.mrb[0].mxu0 %v855
        %v923 = vpop.f32.mrb[0].mxu0
        %v924 = vadd.f32 0.0, %v923
        %v925 = vpop.f32.mrb[0].mxu0
        %926 = vdwg.mxu0
        %v927 = vadd.f32 %v853, %v924
        %928 = vst.msk [vmem:[%s852] sm:$0xff] %vm381, %v927
        %s929 = scalar_lea.vmem %s281, 56 [#allocation4]
        %v930 = vld [vmem:[%s929] sm:$0xff]
        %v932 = vsel %vm381, %v927, 0
        %934 = vmatprep.subr.mxu0 0.0
        %935 = vmatpush1.msra.mxu0 %v301
        %936 = vmatprep.subr.mxu0 0.0
        %937 = vmatpush1.msra.mxu0 %v302
        %938 = vmatprep.subr.mxu0 0.0
        %939 = vmatpush1.msra.mxu0 %v303
        %940 = vmatprep.subr.mxu0 0.0
        %941 = vmatpush1.msra.mxu0 %v304
        %942 = vmatprep.subr.mxu0 0.0
        %943 = vmatpush1.msra.mxu0 0.0
        %944 = vmatprep.subr.mxu0 0.0
        %945 = vmatpush1.msra.mxu0 0.0
        %946 = vmatprep.subr.mxu0 0.0
        %947 = vmatpush1.msra.mxu0 0.0
        %948 = vmatprep.subr.mxu0 0.0
        %949 = vmatpush1.msra.mxu0 0.0
        %950 = vmatprep.subr.mxu0 0.0
        %951 = vmatpush1.msra.mxu0 0.0
        %952 = vmatprep.subr.mxu0 0.0
        %953 = vmatpush1.msra.mxu0 0.0
        %954 = vmatprep.subr.mxu0 0.0
        %955 = vmatpush1.msra.mxu0 0.0
        %956 = vmatprep.subr.mxu0 0.0
        %957 = vmatpush1.msra.mxu0 0.0
        %958 = vmatprep.subr.mxu0 0.0
        %959 = vmatpush1.msra.mxu0 0.0
        %960 = vmatprep.subr.mxu0 0.0
        %961 = vmatpush1.msra.mxu0 0.0
        %962 = vmatprep.subr.mxu0 0.0
        %963 = vmatpush1.msra.mxu0 0.0
        %964 = vmatprep.subr.mxu0 0.0
        %965 = vmatpush1.msra.mxu0 0.0
        %966 = vmatprep.subr.mxu0 0.0
        %967 = vmatpush1.msra.mxu0 0.0
        %968 = vmatprep.subr.mxu0 0.0
        %969 = vmatpush1.msra.mxu0 0.0
        %970 = vmatprep.subr.mxu0 0.0
        %971 = vmatpush1.msra.mxu0 0.0
        %972 = vmatprep.subr.mxu0 0.0
        %973 = vmatpush1.msra.mxu0 0.0
        %974 = vmatprep.subr.mxu0 0.0
        %975 = vmatpush1.msra.mxu0 0.0
        %976 = vmatprep.subr.mxu0 0.0
        %977 = vmatpush1.msra.mxu0 0.0
        %978 = vmatprep.subr.mxu0 0.0
        %979 = vmatpush1.msra.mxu0 0.0
        %980 = vmatprep.subr.mxu0 0.0
        %981 = vmatpush1.msra.mxu0 0.0
        %982 = vmatprep.subr.mxu0 0.0
        %983 = vmatpush1.msra.mxu0 0.0
        %984 = vmatprep.subr.mxu0 0.0
        %985 = vmatpush1.msra.mxu0 0.0
        %986 = vmatprep.subr.mxu0 0.0
        %987 = vmatpush1.msra.mxu0 0.0
        %988 = vmatprep.subr.mxu0 0.0
        %989 = vmatpush1.msra.mxu0 0.0
        %990 = vmatprep.subr.mxu0 0.0
        %991 = vmatpush1.msra.mxu0 0.0
        %992 = vmatprep.subr.mxu0 0.0
        %993 = vmatpush1.msra.mxu0 0.0
        %994 = vmatprep.subr.mxu0 0.0
        %995 = vmatpush1.msra.mxu0 0.0
        %996 = vmatprep.subr.mxu0 0.0
        %997 = vmatpush1.msra.mxu0 0.0
        %998 = vmatprep.mubr.f32.mxu0 0.0
        %999 = vmatmul.mubr.f32.gmra.mrb[0].mxu0 %v932
        %v1000 = vpop.f32.mrb[0].mxu0
        %v1001 = vadd.f32 0.0, %v1000
        %v1002 = vpop.f32.mrb[0].mxu0
        %1003 = vdwg.mxu0
        %v1004 = vadd.f32 %v930, %v1001
        %1005 = vst.msk [vmem:[%s929] sm:$0xff] %vm381, %v1004
        %1006 = vst.msk [vmem:[#allocation2] sm:$0xff] %vm381, %v1004
        %v1007 = vld [vmem:[%s4] sm:$0x1]
        %v1008 = vld [vmem:[%s281] sm:$0xff]
        %v1009 = vld [vmem:[%s281 + $0x8] sm:$0xff]
        %v1010 = vld [vmem:[%s281 + $0x10] sm:$0xff]
        %v1011 = vld [vmem:[%s281 + $0x18] sm:$0xff]
        %v1012 = vld [vmem:[%s281 + $0x20] sm:$0xff]
        %v1013 = vld [vmem:[%s281 + $0x28] sm:$0xff]
        %v1014 = vld [vmem:[%s281 + $0x30] sm:$0xff]
        %v1015 = vld [vmem:[%s281 + $0x38] sm:$0xff]
        %v1017 = vlaneseq
        %v1018 = vshrl.u32 %v1017, 7
        %v1019 = vsub.s32 0, %v1018
        %v1020 = vrot.slane %v1007, %v1019
        %v1022 = vmul.f32 %v1008, %v1020
        %v1023 = vmul.f32 %v1009, %v1020
        %v1024 = vmul.f32 %v1010, %v1020
        %v1025 = vmul.f32 %v1011, %v1020
        %v1026 = vmul.f32 %v1012, %v1020
        %v1027 = vmul.f32 %v1013, %v1020
        %v1028 = vmul.f32 %v1014, %v1020
        %v1029 = vmul.f32 %v1015, %v1020
        %v1030 = vsel %vm381, %v1022, 0.0
        %1031 = vadd.xlane.f32.xlu0 %v1030
        %v1032 = vpop.xlane.xlu0 %1031
        %v1033 = vsel %vm381, %v1023, 0.0
        %1034 = vadd.xlane.f32.xlu0 %v1033
        %v1035 = vpop.xlane.xlu0 %1034
        %v1036 = vsel %vm381, %v1024, 0.0
        %1037 = vadd.xlane.f32.xlu0 %v1036
        %v1038 = vpop.xlane.xlu0 %1037
        %v1039 = vsel %vm381, %v1025, 0.0
        %1040 = vadd.xlane.f32.xlu0 %v1039
        %v1041 = vpop.xlane.xlu0 %1040
        %v1042 = vsel %vm381, %v1026, 0.0
        %1043 = vadd.xlane.f32.xlu0 %v1042
        %v1044 = vpop.xlane.xlu0 %1043
        %v1045 = vsel %vm381, %v1027, 0.0
        %1046 = vadd.xlane.f32.xlu0 %v1045
        %v1047 = vpop.xlane.xlu0 %1046
        %v1048 = vsel %vm381, %v1028, 0.0
        %1049 = vadd.xlane.f32.xlu0 %v1048
        %v1050 = vpop.xlane.xlu0 %1049
        %v1051 = vsel %vm381, %v1029, 0.0
        %1052 = vadd.xlane.f32.xlu0 %v1051
        %v1053 = vpop.xlane.xlu0 %1052
        %v1054 = vld [vmem:[#allocation3] sm:$0x1]
        %v1056 = vlaneseq
        %v1057 = vshrl.u32 %v1056, 7
        %v1058 = vsub.s32 0, %v1057
        %v1059 = vrot.slane %v1054, %v1058
        %1060 = vset.pattern.permute.xlu0 0
        %1061 = vperm.xlu0 %1060, %v1059
        %v1062 = vpop.permute.xlu0 %1061
        %v1064 = vadd.f32 %v1032, %v1062
        %v1065 = vadd.f32 %v1035, %v1062
        %v1066 = vadd.f32 %v1038, %v1062
        %v1067 = vadd.f32 %v1041, %v1062
        %v1068 = vadd.f32 %v1044, %v1062
        %v1069 = vadd.f32 %v1047, %v1062
        %v1070 = vadd.f32 %v1050, %v1062
        %v1071 = vadd.f32 %v1053, %v1062
        %v1080 = vlaneseq
        %v1081 = vand.u32 %v1080, 127
        %v1082 = vlaneseq
        %v1083 = vshrl.u32 %v1082, 7
        %v1084 = vsub.s32 %v1081, %v1083
        %v1085 = vrot.slane %v1064, %v1084
        %v1086 = vlaneseq
        %v1087 = vshrl.u32 %v1086, 7
        %v1088 = vsub.s32 %v1081, %v1087
        %v1089 = vrot.slane %v1065, %v1088
        %v1090 = vlaneseq
        %v1091 = vshrl.u32 %v1090, 7
        %v1092 = vsub.s32 %v1081, %v1091
        %v1093 = vrot.slane %v1066, %v1092
        %v1094 = vlaneseq
        %v1095 = vshrl.u32 %v1094, 7
        %v1096 = vsub.s32 %v1081, %v1095
        %v1097 = vrot.slane %v1067, %v1096
        %v1098 = vlaneseq
        %v1099 = vshrl.u32 %v1098, 7
        %v1100 = vsub.s32 %v1081, %v1099
        %v1101 = vrot.slane %v1068, %v1100
        %v1102 = vlaneseq
        %v1103 = vshrl.u32 %v1102, 7
        %v1104 = vsub.s32 %v1081, %v1103
        %v1105 = vrot.slane %v1069, %v1104
        %v1106 = vlaneseq
        %v1107 = vshrl.u32 %v1106, 7
        %v1108 = vsub.s32 %v1081, %v1107
        %v1109 = vrot.slane %v1070, %v1108
        %v1110 = vlaneseq
        %v1111 = vshrl.u32 %v1110, 7
        %v1112 = vsub.s32 %v1081, %v1111
        %v1113 = vrot.slane %v1071, %v1112
        %vm1114 = vcmask 1041409
        %v1115 = vsel %vm1114, %v1089, %v1085
        %vm1116 = vcmask 1042434
        %v1117 = vsel %vm1116, %v1093, %v1115
        %vm1118 = vcmask 1043459
        %v1119 = vsel %vm1118, %v1097, %v1117
        %vm1120 = vcmask 1044484
        %v1121 = vsel %vm1120, %v1101, %v1119
        %vm1122 = vcmask 1045509
        %v1123 = vsel %vm1122, %v1105, %v1121
        %vm1124 = vcmask 1046534
        %v1125 = vsel %vm1124, %v1109, %v1123
        %vm1126 = vcmask 1047559
        %v1127 = vsel %vm1126, %v1113, %v1125
        %vm1129 = vcmask 64512
        %1130 = vst.msk [vmem:[%s291] sm:$0xff] %vm1129, %v1127
        %p1131 = scmp.lt.s32.totalorder %s24, 1
        %s1132 = scalar_select %p1131, %s24, 1
        %s1133 = smul.addr %s1132, 8
        %s1134 = scalar_lea.vmem %s6, %s1133
        %s1135 = sand.u32 %s189, 1
        %s1136 = scalar_lea.sflag [#allocation5], %s1135
        %s1137 = sand.u32 %s189, 1
        %s1138 = smul.addr %s1137, 64
        %s1139 = scalar_lea.vmem [#allocation4], %s1138
        // Predicated region
        $region49: #{tpu_custom_call.1} parent=43 // pred_check
          %p1140 = pneg %p173
        $region50: #{tpu_custom_call.1} parent=43 // pred_check_branch
          %1142 = sbr.rel (%p1140) target = $region52
        $region51: #{tpu_custom_call.1} parent=43 // pred_region
          _
        $region52: #{tpu_custom_call.1} parent=43 // pred_fallthru
          _
        // Predicated region
        $region53: #{tpu_custom_call.1} parent=43 // pred_check
          %p1143 = pneg %p199
        $region54: #{tpu_custom_call.1} parent=43 // pred_check_branch
          %1145 = sbr.rel (%p1143) target = $region56
        $region55: #{tpu_custom_call.1} parent=43 // pred_region
          %s1146 = smul.u32 8, %s24
          %s1148 = ssub.s32 1024, 1024
          %1149 = vsyncadd %s1136, %s1148
          %s1150 = smul.addr %s1146, 128
          %s1151 = scalar_lea.hbm %s7, %s1150
          %s1152 = sshll.u32 %s1139, 4
          %s1153 = int_to_ptr.vmem [resolvable:$true] %s1152
          %1158 = dma.vmem_to_hbm [thread:$0]  %s1153, 1024, %s1151, %s1136, 128, 128, 8
        $region56: #{tpu_custom_call.1} parent=43 // pred_fallthru
          _
      $region44: #{tpu_custom_call.1} parent=5 // pred_fallthru
        _
      %p1159 = scmp.le.s32.totalorder 2, %s19
      // Predicated region
      $region57: #{tpu_custom_call.1} parent=5 // pred_check
        %p1160 = pneg %p1159
      $region58: #{tpu_custom_call.1} parent=5 // pred_check_branch
        %1162 = sbr.rel (%p1160) target = $region60
      $region59: #{tpu_custom_call.1} parent=5 // pred_region
        %s1163 = ssub.s32 %s19, 2
        // Predicated region
        $region61: #{tpu_custom_call.1} parent=59 // pred_check
          %p1164 = pneg %p179
        $region62: #{tpu_custom_call.1} parent=59 // pred_check_branch
          %1166 = sbr.rel (%p1164) target = $region64
        $region63: #{tpu_custom_call.1} parent=59 // pred_region
          %p1167 = scmp.lt.s32.totalorder %s25, 1
          %s1168 = scalar_select %p1167, %s25, 1
          %s1169 = smul.addr %s1168, 8
          %s1170 = scalar_lea.vmem %s6, %s1169
        $region64: #{tpu_custom_call.1} parent=59 // pred_fallthru
          _
        // Predicated region
        $region65: #{tpu_custom_call.1} parent=59 // pred_check
          %p1171 = pneg %p205
        $region66: #{tpu_custom_call.1} parent=59 // pred_check_branch
          %1173 = sbr.rel (%p1171) target = $region68
        $region67: #{tpu_custom_call.1} parent=59 // pred_region
          %s1174 = sand.u32 %s190, 1
          %s1175 = scalar_lea.sflag [#allocation5], %s1174
          %s1176 = sand.u32 %s190, 1
          %s1177 = smul.addr %s1176, 64
          %s1178 = scalar_lea.vmem [#allocation4], %s1177
          %1179 = dma.done %s1175, 1024
        $region68: #{tpu_custom_call.1} parent=59 // pred_fallthru
          _
      $region60: #{tpu_custom_call.1} parent=5 // pred_fallthru
        _
    $region6: #{tpu_custom_call.1} parent=1 // loop_footer
      %s23 = sadd.s32 1, %s19
    $region7: #{tpu_custom_call.1} parent=1 // loop_footer_branch
      %18 = sbr.rel target = $region3
    $region8: #{tpu_custom_call.1} parent=1 // loop_exit
      _
    %1180 = vsyncpa [#allocation5], 1
    %s1181 = scalar_lea.sflag [#allocation5], 1
    %1182 = vsyncpa %s1181, 1

</llo_original>
